<compile_context>
chip_gen: v7x
topology: tpu7x:2x2x1
jax: 0.10.0
libtpu: 0.0.40
codegen_flags: <defaults>
</compile_context>

<pallas_src>
import jax
import jax.numpy as jnp
from jax import lax
from jax.experimental import pallas as pl
from jax.experimental.pallas import tpu as pltpu


# ----------------------------- glue (plain JAX) -----------------------------

def build_normalized_adj(edge_index, num_nodes):
    """Dense GCN-normalized adjacency: D^-1/2 (A + I) D^-1/2 (symmetric)."""
    src, dst = edge_index[0], edge_index[1]
    a = jnp.zeros((num_nodes, num_nodes), jnp.float32)
    a = a.at[src, dst].set(1.0)
    a = jnp.maximum(a, a.T)                                     # undirected
    eye = jnp.eye(num_nodes, dtype=jnp.float32)
    a = a * (1.0 - eye) + eye                                   # self loops
    dinv = lax.rsqrt(a.sum(axis=1))
    return a * dinv[:, None] * dinv[None, :]


def init_params(key, in_channels, hidden, nclass, layers):
    """Deterministic nn.Linear-style uniform init for all weights/biases."""
    def lin_init(k, out_dim, in_dim):
        bound = 1.0 / jnp.sqrt(jnp.float32(in_dim))
        kw, kb = jax.random.split(k)
        w = jax.random.uniform(kw, (out_dim, in_dim), jnp.float32, -bound, bound)
        b = jax.random.uniform(kb, (out_dim,), jnp.float32, -bound, bound)
        return w, b

    ks = jax.random.split(key, layers + 1)
    w1, b1 = lin_init(ks[0], hidden, in_channels)
    conv_ws, conv_bs = [], []
    for i in range(layers - 1):
        w, b = lin_init(ks[1 + i], hidden, hidden)
        conv_ws.append(w)
        conv_bs.append(b)
    wlin, blin = lin_init(ks[layers], nclass, layers * hidden)
    return {
        "conv1_weight": w1, "conv1_bias": b1,                   # (h, in), (h,)
        "conv_weights": jnp.stack(conv_ws),                     # (L-1, h, h)
        "conv_biases": jnp.stack(conv_bs),                      # (L-1, h)
        "lin_weight": wlin, "lin_bias": blin,                   # (C, L*h), (C,)
    }


def gcn_jknet_reference(params, x, adj, layers):
    """Plain-JAX reference of the PyTorch forward (eval mode)."""
    h = jnp.maximum(adj @ (x @ params["conv1_weight"].T) + params["conv1_bias"], 0.0)
    outs = [h]
    for i in range(layers - 1):
        h = jnp.maximum(
            adj @ (h @ params["conv_weights"][i].T) + params["conv_biases"][i], 0.0)
        outs.append(h)
    cat = jnp.concatenate(outs, axis=-1)
    return cat @ params["lin_weight"].T + params["lin_bias"]


# ------------------------------- Pallas kernel ------------------------------

def _gcn_jknet_kernel(z0_ref, a_ref, wk_ref, bk_ref, wlin_ref, blin_ref,
                      out_ref, h_ref):
    """One grid step = (layer l, node column block j).

    h_ref: (2, hidden, num_node) ping-pong scratch in transposed (feature, node)
    layout; layer l reads slot 1 - (l % 2) and writes slot (l % 2).
    """
    l = pl.program_id(0)
    j = pl.program_id(1)
    tn = a_ref.shape[1]

    # Seed the "previous layer" buffer with the hoisted projection W1 @ X^T.
    @pl.when((l == 0) & (j == 0))
    def _():
        h_ref[1] = z0_ref[...]

    parity = l % 2
    h_prev = h_ref[1 - parity]                         # (hidden, num_node)
    a_blk = a_ref[...]                                 # (num_node, tn)

    # GCNConv in transposed layout: H_l = relu(W_l @ (H_{l-1} @ A_blk) + b_l).
    # (Layer 0's real weight is folded into z0, so wk[0] is the identity.)
    m = jnp.dot(h_prev, a_blk, preferred_element_type=jnp.float32)        # (h, tn)
    h_new = jnp.maximum(
        jnp.dot(wk_ref[l], m, preferred_element_type=jnp.float32) + bk_ref[l],
        0.0)
    # TODO(synk): F.dropout(p=0.5) only acts in training; eval forward is identity.

    col = pl.ds(pl.multiple_of(j * tn, tn), tn)

    @pl.when(parity == 0)
    def _():
        h_ref[0, :, col] = h_new

    @pl.when(parity == 1)
    def _():
        h_ref[1, :, col] = h_new

    # JumpingKnowledge('cat') + lin1 folded into a per-layer accumulation:
    #   out = b_lin + sum_l  W_lin[:, l*h:(l+1)*h] @ H_l
    contrib = jnp.dot(wlin_ref[l], h_new, preferred_element_type=jnp.float32)

    @pl.when(l == 0)
    def _():
        out_ref[:, col] = blin_ref[...] + contrib

    @pl.when(l != 0)
    def _():
        out_ref[:, col] = out_ref[:, col] + contrib


def gcn_jknet_forward(params, x, adj, *, layers=8, tile_n=128):
    """GCN_JKNet forward (eval mode).

    x:   (num_node, in_channels) node features.
    adj: (num_node, num_node) dense sym-normalized adjacency with self loops
         (the dense equivalent of GCNConv's normalization of edge_index).
    Returns logits of shape (num_node, out_channels).
    """
    num_node, _ = x.shape
    hidden = params["conv1_weight"].shape[0]
    nclass = params["lin_weight"].shape[0]
    assert num_node % tile_n == 0, "pad the graph so num_node % tile_n == 0"
    nb = num_node // tile_n

    # Hoisted one-time input projection (keeps the feature matrix out of VMEM).
    z0 = params["conv1_weight"] @ x.T                                   # (h, N)

    # Per-layer weights in transposed layout; layer 0's weight is identity.
    wk = jnp.concatenate(
        [jnp.eye(hidden, dtype=jnp.float32)[None], params["conv_weights"]], axis=0)
    bk = jnp.concatenate(
        [params["conv1_bias"][None], params["conv_biases"]], axis=0)[:, :, None]
    wlin = params["lin_weight"].reshape(nclass, layers, hidden).transpose(1, 0, 2)
    blin = params["lin_bias"][:, None]

    grid_spec = pltpu.PrefetchScalarGridSpec(
        num_scalar_prefetch=0,
        grid=(layers, nb),
        in_specs=[
            pl.BlockSpec((hidden, num_node), lambda l, j: (0, 0)),          # z0
            pl.BlockSpec((num_node, tile_n), lambda l, j: (0, j)),          # adj cols
            pl.BlockSpec((layers, hidden, hidden), lambda l, j: (0, 0, 0)),  # conv W
            pl.BlockSpec((layers, hidden, 1), lambda l, j: (0, 0, 0)),       # conv b
            pl.BlockSpec((layers, nclass, hidden), lambda l, j: (0, 0, 0)),  # lin1 W
            pl.BlockSpec((nclass, 1), lambda l, j: (0, 0)),                  # lin1 b
        ],
        out_specs=pl.BlockSpec((nclass, num_node), lambda l, j: (0, 0)),     # resident
        scratch_shapes=[pltpu.VMEM((2, hidden, num_node), jnp.float32)],
    )

    flops = int(layers * (2 * hidden * num_node * num_node
                          + 2 * hidden * hidden * num_node
                          + 2 * nclass * hidden * num_node))
    bytes_accessed = int(4 * (layers * num_node * num_node      # adj re-streamed per layer
                              + hidden * num_node               # z0
                              + nclass * num_node               # output
                              + layers * hidden * (hidden + 1 + nclass)))

    vmem_need = 4 * (2 * num_node * tile_n       # adj column block, double buffered
                     + 2 * hidden * num_node     # z0 (double buffered)
                     + 2 * hidden * num_node     # H ping-pong scratch
                     + 2 * nclass * num_node     # output block
                     + 2 * layers * hidden * (hidden + 1 + nclass))
    vmem_limit = int(min(max(vmem_need + (2 << 20), 16 << 20), 64 << 20))

    out_cn = pl.pallas_call(
        _gcn_jknet_kernel,
        out_shape=jax.ShapeDtypeStruct((nclass, num_node), jnp.float32),
        grid_spec=grid_spec,
        compiler_params=pltpu.CompilerParams(
            dimension_semantics=("arbitrary", "arbitrary"),
            vmem_limit_bytes=vmem_limit),
        cost_estimate=pl.CostEstimate(
            flops=flops, transcendentals=0, bytes_accessed=bytes_accessed),
    )(z0, adj, wk, bk, wlin, blin)

    return out_cn.T                                               # (N, nclass)


# --------------------------------- example ----------------------------------

if __name__ == "__main__":
    num_node, in_channels, hidden, nclass, layers = 256, 16, 32, 4, 8
    tile_n = 128

    key = jax.random.PRNGKey(0)
    k_src, k_dst, k_x, k_p = jax.random.split(key, 4)

    # Random undirected graph as edge_index (2, E).
    num_edges = 4 * num_node
    src = jax.random.randint(k_src, (num_edges,), 0, num_node)
    dst = jax.random.randint(k_dst, (num_edges,), 0, num_node)
    edge_index = jnp.stack([src, dst])

    adj = build_normalized_adj(edge_index, num_node)
    x = jax.random.normal(k_x, (num_node, in_channels), jnp.float32)
    params = init_params(k_p, in_channels, hidden, nclass, layers)

    out = gcn_jknet_forward(params, x, adj, layers=layers, tile_n=tile_n)
    out = jax.block_until_ready(out)

    ref = gcn_jknet_reference(params, x, adj, layers)
    assert out.shape == (num_node, nclass)
    assert bool(jnp.all(jnp.isfinite(out)))
    max_err = float(jnp.max(jnp.abs(out - ref)))
    assert max_err < 5e-3, f"mismatch vs reference: {max_err}"
    print("KERNEL_OK")
</pallas_src>

<mosaic_0001>
module attributes {stable_mosaic.version = 11 : i64} {
  func.func @_gcn_jknet_kernel(%arg0: i32, %arg1: i32, %arg2: memref<32x256xf32, #tpu.memory_space<vmem>>, %arg3: memref<256x128xf32, #tpu.memory_space<vmem>>, %arg4: memref<8x32x32xf32, #tpu.memory_space<vmem>>, %arg5: memref<8x32x1xf32, #tpu.memory_space<vmem>>, %arg6: memref<8x4x32xf32, #tpu.memory_space<vmem>>, %arg7: memref<4x1xf32, #tpu.memory_space<vmem>>, %arg8: memref<4x256xf32, #tpu.memory_space<vmem>>, %arg9: memref<2x32x256xf32, #tpu.memory_space<vmem>>) attributes {dimension_semantics = [#tpu.dimension_semantics<arbitrary>, #tpu.dimension_semantics<arbitrary>], iteration_bounds = array<i64: 8, 2>, scalar_prefetch = 0 : i64, scratch_operands = 1 : i64, tpu.core_type = #tpu.core_type<tc>, window_params = [{pipeline_mode = #tpu.pipeline_mode<synchronous>, transform_indices = @transform_0, window_bounds = array<i64: 32, 256>}, {transform_indices = @transform_1, window_bounds = array<i64: 256, 128>}, {pipeline_mode = #tpu.pipeline_mode<synchronous>, transform_indices = @transform_2, window_bounds = array<i64: 8, 32, 32>}, {pipeline_mode = #tpu.pipeline_mode<synchronous>, transform_indices = @transform_3, window_bounds = array<i64: 8, 32, 1>}, {pipeline_mode = #tpu.pipeline_mode<synchronous>, transform_indices = @transform_4, window_bounds = array<i64: 8, 4, 32>}, {pipeline_mode = #tpu.pipeline_mode<synchronous>, transform_indices = @transform_5, window_bounds = array<i64: 4, 1>}, {pipeline_mode = #tpu.pipeline_mode<synchronous>, transform_indices = @transform_6, window_bounds = array<i64: 4, 256>}]} {
    %c0_i32 = arith.constant 0 : i32
    %0 = arith.cmpi eq, %arg0, %c0_i32 : i32
    %c0_i32_0 = arith.constant 0 : i32
    %1 = arith.cmpi eq, %arg1, %c0_i32_0 : i32
    %2 = arith.andi %0, %1 : i1
    %3 = arith.extui %2 : i1 to i32
    %c0_i32_1 = arith.constant 0 : i32
    %4 = arith.cmpi ne, %3, %c0_i32_1 : i32
    scf.if %4 {
      %c0_27 = arith.constant 0 : index
      %c0_28 = arith.constant 0 : index
      %50 = vector.load %arg2[%c0_27, %c0_28] : memref<32x256xf32, #tpu.memory_space<vmem>>, vector<32x256xf32>
      %c1 = arith.constant 1 : index
      %c0_29 = arith.constant 0 : index
      %c0_30 = arith.constant 0 : index
      %51 = vector.load %arg9[%c1, %c0_29, %c0_30] : memref<2x32x256xf32, #tpu.memory_space<vmem>>, vector<1x32x256xf32>
      %52 = vector.shape_cast %51 : vector<1x32x256xf32> to vector<32x256xf32>
      %53 = vector.shape_cast %50 : vector<32x256xf32> to vector<1x32x256xf32>
      tpu.vector_store %arg9[%c1, %c0_29, %c0_30], %53 {strides = array<i32>} : memref<2x32x256xf32, #tpu.memory_space<vmem>>, vector<1x32x256xf32>,
    } else {
    }
    %c2_i32 = arith.constant 2 : i32
    %c0_i32_2 = arith.constant 0 : i32
    %5 = arith.cmpi eq, %c2_i32, %c0_i32_2 : i32
    %c1_i32 = arith.constant 1 : i32
    %6 = arith.select %5, %c1_i32, %c2_i32 : i32
    %7 = arith.remsi %arg0, %6 : i32
    %c0_i32_3 = arith.constant 0 : i32
    %8 = arith.cmpi ne, %7, %c0_i32_3 : i32
    %c0_i32_4 = arith.constant 0 : i32
    %9 = arith.cmpi slt, %7, %c0_i32_4 : i32
    %c0_i32_5 = arith.constant 0 : i32
    %10 = arith.cmpi slt, %6, %c0_i32_5 : i32
    %11 = arith.xori %9, %10 : i1
    %12 = arith.andi %11, %8 : i1
    %13 = arith.addi %7, %6 : i32
    %14 = arith.select %12, %13, %7 : i32
    %c1_i32_6 = arith.constant 1 : i32
    %15 = arith.subi %c1_i32_6, %14 : i32
    %16 = arith.index_cast %15 : i32 to index
    %c0 = arith.constant 0 : index
    %c0_7 = arith.constant 0 : index
    %17 = vector.load %arg9[%16, %c0, %c0_7] : memref<2x32x256xf32, #tpu.memory_space<vmem>>, vector<1x32x256xf32>
    %18 = vector.shape_cast %17 : vector<1x32x256xf32> to vector<32x256xf32>
    %c0_8 = arith.constant 0 : index
    %c0_9 = arith.constant 0 : index
    %19 = vector.load %arg3[%c0_8, %c0_9] : memref<256x128xf32, #tpu.memory_space<vmem>>, vector<256x128xf32>
    %cst = arith.constant dense<0.000000e+00> : vector<32x128xf32>
    %20 = tpu.matmul %18, %19, %cst {dimension_numbers = #tpu.dot_dimension_numbers<[1], [0], [0], [1], [0, 0, 1, 1], [], []>} : vector<32x256xf32>, vector<256x128xf32>, vector<32x128xf32> -> vector<32x128xf32>
    %21 = arith.index_cast %arg0 : i32 to index
    %c0_10 = arith.constant 0 : index
    %c0_11 = arith.constant 0 : index
    %22 = vector.load %arg4[%21, %c0_10, %c0_11] : memref<8x32x32xf32, #tpu.memory_space<vmem>>, vector<1x32x32xf32>
    %23 = vector.shape_cast %22 : vector<1x32x32xf32> to vector<32x32xf32>
    %cst_12 = arith.constant dense<0.000000e+00> : vector<32x128xf32>
    %24 = tpu.matmul %23, %20, %cst_12 {dimension_numbers = #tpu.dot_dimension_numbers<[1], [0], [0], [1], [0, 0, 1, 1], [], []>} : vector<32x32xf32>, vector<32x128xf32>, vector<32x128xf32> -> vector<32x128xf32>
    %25 = arith.index_cast %arg0 : i32 to index
    %c0_13 = arith.constant 0 : index
    %c0_14 = arith.constant 0 : index
    %26 = vector.load %arg5[%25, %c0_13, %c0_14] : memref<8x32x1xf32, #tpu.memory_space<vmem>>, vector<1x32x1xf32>
    %27 = vector.shape_cast %26 : vector<1x32x1xf32> to vector<32x1xf32>
    %28 = vector.broadcast %27 : vector<32x1xf32> to vector<32x128xf32>
    %29 = arith.addf %24, %28 : vector<32x128xf32>
    %cst_15 = arith.constant 0.000000e+00 : f32
    %30 = vector.broadcast %cst_15 : f32 to vector<32x128xf32>
    %31 = arith.maximumf %29, %30 : vector<32x128xf32>
    %c128_i32 = arith.constant 128 : i32
    %32 = arith.muli %arg1, %c128_i32 : i32
    %33 = tpu.assume_multiple %32, 128 : i32
    %c0_i32_16 = arith.constant 0 : i32
    %34 = arith.cmpi eq, %14, %c0_i32_16 : i32
    %35 = arith.extui %34 : i1 to i32
    %c0_i32_17 = arith.constant 0 : i32
    %36 = arith.cmpi ne, %35, %c0_i32_17 : i32
    scf.if %36 {
      %c0_27 = arith.constant 0 : index
      %c0_28 = arith.constant 0 : index
      %50 = arith.index_cast %33 : i32 to index
      %51 = vector.load %arg9[%c0_27, %c0_28, %50] : memref<2x32x256xf32, #tpu.memory_space<vmem>>, vector<1x32x128xf32>
      %52 = vector.shape_cast %51 : vector<1x32x128xf32> to vector<32x128xf32>
      %53 = vector.shape_cast %31 : vector<32x128xf32> to vector<1x32x128xf32>
      tpu.vector_store %arg9[%c0_27, %c0_28, %50], %53 {strides = array<i32>} : memref<2x32x256xf32, #tpu.memory_space<vmem>>, vector<1x32x128xf32>,
    } else {
    }
    %c1_i32_18 = arith.constant 1 : i32
    %37 = arith.cmpi eq, %14, %c1_i32_18 : i32
    %38 = arith.extui %37 : i1 to i32
    %c0_i32_19 = arith.constant 0 : i32
    %39 = arith.cmpi ne, %38, %c0_i32_19 : i32
    scf.if %39 {
      %c1 = arith.constant 1 : index
      %c0_27 = arith.constant 0 : index
      %50 = arith.index_cast %33 : i32 to index
      %51 = vector.load %arg9[%c1, %c0_27, %50] : memref<2x32x256xf32, #tpu.memory_space<vmem>>, vector<1x32x128xf32>
      %52 = vector.shape_cast %51 : vector<1x32x128xf32> to vector<32x128xf32>
      %53 = vector.shape_cast %31 : vector<32x128xf32> to vector<1x32x128xf32>
      tpu.vector_store %arg9[%c1, %c0_27, %50], %53 {strides = array<i32>} : memref<2x32x256xf32, #tpu.memory_space<vmem>>, vector<1x32x128xf32>,
    } else {
    }
    %40 = arith.index_cast %arg0 : i32 to index
    %c0_20 = arith.constant 0 : index
    %c0_21 = arith.constant 0 : index
    %41 = vector.load %arg6[%40, %c0_20, %c0_21] : memref<8x4x32xf32, #tpu.memory_space<vmem>>, vector<1x4x32xf32>
    %42 = vector.shape_cast %41 : vector<1x4x32xf32> to vector<4x32xf32>
    %cst_22 = arith.constant dense<0.000000e+00> : vector<4x128xf32>
    %43 = tpu.matmul %42, %31, %cst_22 {dimension_numbers = #tpu.dot_dimension_numbers<[1], [0], [0], [1], [0, 0, 1, 1], [], []>} : vector<4x32xf32>, vector<32x128xf32>, vector<4x128xf32> -> vector<4x128xf32>
    %c0_i32_23 = arith.constant 0 : i32
    %44 = arith.cmpi eq, %arg0, %c0_i32_23 : i32
    %45 = arith.extui %44 : i1 to i32
    %c0_i32_24 = arith.constant 0 : i32
    %46 = arith.cmpi ne, %45, %c0_i32_24 : i32
    scf.if %46 {
      %c0_27 = arith.constant 0 : index
      %c0_28 = arith.constant 0 : index
      %50 = vector.load %arg7[%c0_27, %c0_28] : memref<4x1xf32, #tpu.memory_space<vmem>>, vector<4x1xf32>
      %51 = vector.broadcast %50 : vector<4x1xf32> to vector<4x128xf32>
      %52 = arith.addf %51, %43 : vector<4x128xf32>
      %c0_29 = arith.constant 0 : index
      %53 = arith.index_cast %33 : i32 to index
      %54 = vector.load %arg8[%c0_29, %53] : memref<4x256xf32, #tpu.memory_space<vmem>>, vector<4x128xf32>
      tpu.vector_store %arg8[%c0_29, %53], %52 {strides = array<i32>} : memref<4x256xf32, #tpu.memory_space<vmem>>, vector<4x128xf32>,
    } else {
    }
    %c0_i32_25 = arith.constant 0 : i32
    %47 = arith.cmpi ne, %arg0, %c0_i32_25 : i32
    %48 = arith.extui %47 : i1 to i32
    %c0_i32_26 = arith.constant 0 : i32
    %49 = arith.cmpi ne, %48, %c0_i32_26 : i32
    scf.if %49 {
      %c0_27 = arith.constant 0 : index
      %50 = arith.index_cast %33 : i32 to index
      %51 = vector.load %arg8[%c0_27, %50] : memref<4x256xf32, #tpu.memory_space<vmem>>, vector<4x128xf32>
      %52 = arith.addf %51, %43 : vector<4x128xf32>
      %c0_28 = arith.constant 0 : index
      %53 = arith.index_cast %33 : i32 to index
      %54 = vector.load %arg8[%c0_28, %53] : memref<4x256xf32, #tpu.memory_space<vmem>>, vector<4x128xf32>
      tpu.vector_store %arg8[%c0_28, %53], %52 {strides = array<i32>} : memref<4x256xf32, #tpu.memory_space<vmem>>, vector<4x128xf32>,
    } else {
    }
    return
  }
  func.func @transform_0(%arg0: i32, %arg1: i32) -> (i32, i32) {
    %c0_i32 = arith.constant 0 : i32
    %c0_i32_0 = arith.constant 0 : i32
    %c0_i32_1 = arith.constant 0 : i32
    return %c0_i32, %c0_i32_0 : i32, i32
  }
  func.func @transform_1(%arg0: i32, %arg1: i32) -> (i32, i32) {
    %c0_i32 = arith.constant 0 : i32
    %c0_i32_0 = arith.constant 0 : i32
    return %c0_i32, %arg1 : i32, i32
  }
  func.func @transform_2(%arg0: i32, %arg1: i32) -> (i32, i32, i32) {
    %c0_i32 = arith.constant 0 : i32
    %c0_i32_0 = arith.constant 0 : i32
    %c0_i32_1 = arith.constant 0 : i32
    %c0_i32_2 = arith.constant 0 : i32
    return %c0_i32, %c0_i32_0, %c0_i32_1 : i32, i32, i32
  }
  func.func @transform_3(%arg0: i32, %arg1: i32) -> (i32, i32, i32) {
    %c0_i32 = arith.constant 0 : i32
    %c0_i32_0 = arith.constant 0 : i32
    %c0_i32_1 = arith.constant 0 : i32
    %c0_i32_2 = arith.constant 0 : i32
    return %c0_i32, %c0_i32_0, %c0_i32_1 : i32, i32, i32
  }
  func.func @transform_4(%arg0: i32, %arg1: i32) -> (i32, i32, i32) {
    %c0_i32 = arith.constant 0 : i32
    %c0_i32_0 = arith.constant 0 : i32
    %c0_i32_1 = arith.constant 0 : i32
    %c0_i32_2 = arith.constant 0 : i32
    return %c0_i32, %c0_i32_0, %c0_i32_1 : i32, i32, i32
  }
  func.func @transform_5(%arg0: i32, %arg1: i32) -> (i32, i32) {
    %c0_i32 = arith.constant 0 : i32
    %c0_i32_0 = arith.constant 0 : i32
    %c0_i32_1 = arith.constant 0 : i32
    return %c0_i32, %c0_i32_0 : i32, i32
  }
  func.func @transform_6(%arg0: i32, %arg1: i32) -> (i32, i32) {
    %c0_i32 = arith.constant 0 : i32
    %c0_i32_0 = arith.constant 0 : i32
    %c0_i32_1 = arith.constant 0 : i32
    return %c0_i32, %c0_i32_0 : i32, i32
  }
}

</mosaic_0001>

<llo_original>
// kernel: tpu_custom_call.1
$region0: #{tpu_custom_call.1}
  #allocation0 [shape = 'u32[]', space=smem, size = 0x4, offset = 0x4, fixed_abs, tag = 'smem constant byte address 0x4 - core index']
  #allocation1 [shape = 'u32[144,128]{1,0:T(1,128)}', space=vmem, size = 0x12000, scoped, tag = 'internal scratch']
  #allocation2 [shape = 'f32[2,32,256]{2,1,0:T(8,128)}', space=vmem, size = 0x10000, scoped, tag = 'scratch operand']
  %s0 = inlined_call_operand.hbm [shape: f32[32,256], index: 0, kind: input, shape index: {}]
  %s1 = inlined_call_operand.hbm [shape: f32[256,256], index: 1, kind: input, shape index: {}]
  %s2 = inlined_call_operand.vmem [shape: f32[8,32,32], index: 2, kind: input, shape index: {}]
  %s3 = inlined_call_operand.vmem [shape: f32[8,32,1], index: 3, kind: input, shape index: {}]
  %s4 = inlined_call_operand.hbm [shape: f32[8,4,32], index: 4, kind: input, shape index: {}]
  %s5 = inlined_call_operand.vmem [shape: f32[4,1], index: 5, kind: input, shape index: {}]
  %s6 = inlined_call_operand.hbm [shape: f32[4,256], index: 6, kind: output, shape index: {}]
  %s7 = sld [smem:[#allocation0]]
  $region89: #{tpu_custom_call.1} parent=0
    _
  %s9 = ssub.s32 1, %s7
  %s10 = scalar_select 0, %s9, %s7
  $region1: #{tpu_custom_call.1} parent=0
    #allocation3 [shape = 'u8[32768]{0}', space=vmem, size = 0x8000, scoped, tag = 'input window, operand 0, single buffered']
    #allocation4 [shape = 's32[2]{0}', space=sflag, size = 0x8, scoped, tag = 'scoped memory for tpu_custom_call.1']
    #allocation5 [shape = 's32[2]{0}', space=sflag, size = 0x8, scoped, tag = 'scoped memory for tpu_custom_call.1']
    #allocation6 [shape = 'u8[262144]{0}', space=vmem, size = 0x40000, scoped, tag = 'input window, operand 1']
    #allocation7 [shape = 's32[2]{0}', space=sflag, size = 0x8, scoped, tag = 'scoped memory for tpu_custom_call.1']
    #allocation8 [shape = 'u8[16384]{0}', space=vmem, size = 0x4000, scoped, tag = 'input window, operand 4, single buffered']
    #allocation9 [shape = 'u8[4096]{0}', space=vmem, size = 0x1000, scoped, tag = 'output window, operand 0, single buffered']
    %11 = vsyncpa [#allocation4], 0
    %12 = vsyncpa [#allocation7], 0
    %s13 = scalar_lea.sflag [#allocation7], 1
    %14 = vsyncpa %s13, 0
    %15 = vsyncpa [#allocation5], 0
    loop: start=0, step=1, limit=18
    $region2: #{tpu_custom_call.1} parent=1 // loop_pre_header
      _
    $region3: #{tpu_custom_call.1} parent=1 // loop_header
      %s17 = sphi 0, %s21
      %p18 = scmp.ge.s32.totalorder %s17, 18
      %s24 = sphi 0, %s36
      %s25 = sphi 0, %s32
      %s26 = sphi 0, %s24
      %s27 = sphi 0, %s25
      %s28 = sphi 0, %s26
      %s29 = sphi 0, %s27
      %s37 = sphi 0, %s37
      %s39 = sphi 0, %s37
      %s40 = sphi 0, %s39
      %s54 = sphi 0, %s40
      %s60 = sphi 0, %s62
      %s63 = sphi 0, %s60
      %s64 = sphi 0, %s63
      %s80 = sphi 0, %s64
      %s84 = sphi 0, %s84
      %s86 = sphi 0, %s84
      %s87 = sphi 0, %s86
      %s101 = sphi 0, %s87
      %s105 = sphi 0, %s105
      %s107 = sphi 0, %s105
      %s108 = sphi 0, %s107
      %s122 = sphi 0, %s108
      %s126 = sphi 0, %s126
      %s128 = sphi 0, %s126
      %s129 = sphi 0, %s128
      %s143 = sphi 0, %s129
      %s147 = sphi 0, %s147
      %s149 = sphi 0, %s147
      %s150 = sphi 0, %s149
      %s164 = sphi 0, %s150
      %s168 = sphi 0, %s168
      %s170 = sphi 0, %s168
      %s171 = sphi 0, %s170
      %s185 = sphi 0, %s171
    $region4: #{tpu_custom_call.1} parent=1 // loop_header_branch
      %20 = sbr.rel (%p18) target = $region8
    $region5: #{tpu_custom_call.1} parent=1 // loop_body
      %s22 = ssub.s32 %s17, 1
      %s23 = ssub.s32 %s17, 2
      %s30 = sadd.s32 1, %s25
      %p31 = scmp.ge.s32.totalorder %s30, 2
      %s32 = scalar_select %p31, 0, %s30
      %s33 = sadd.s32 1, %s24
      %s34 = scalar_select %p31, %s33, %s24
      %p35 = scmp.ge.s32.totalorder %s34, 8
      %s36 = scalar_select %p35, 0, %s34
      %s38 = sadd.s32 %s37, 1
      %p41 = scmp.eq.s32.totalorder %s17, 15
      %p42 = scmp.ne.s32.totalorder %s37, %s39
      %p43 = scmp.eq.s32.totalorder %s17, 0
      %p44 = por %p42, %p43
      %p45 = scmp.ne.s32.totalorder %s37, %s39
      %p46 = scmp.eq.s32.totalorder %s22, 15
      %p47 = por %p45, %p46
      %p48 = scmp.ne.s32.totalorder %s39, %s40
      %p49 = scmp.eq.s32.totalorder %s22, 0
      %p50 = por %p48, %p49
      %p51 = scmp.ne.s32.totalorder %s39, %s40
      %p52 = scmp.eq.s32.totalorder %s23, 15
      %p53 = por %p51, %p52
      %p55 = scmp.ne.s32.totalorder %s40, %s54
      %p56 = scmp.eq.s32.totalorder %s23, 0
      %p57 = por %p55, %p56
      %s58 = ssub.s32 %s25, %s32
      %p59 = scmp.eq.s32.totalorder %s58, 0
      %s61 = sadd.s32 %s60, 1
      %s62 = scalar_select %p59, %s60, %s61
      %p65 = pneg %p59
      %p66 = scmp.eq.s32.totalorder %s17, 15
      %p67 = por %p65, %p66
      %p68 = scmp.ne.s32.totalorder %s60, %s63
      %p69 = scmp.eq.s32.totalorder %s17, 0
      %p70 = por %p68, %p69
      %p71 = scmp.ne.s32.totalorder %s60, %s63
      %p72 = scmp.eq.s32.totalorder %s22, 15
      %p73 = por %p71, %p72
      %p74 = scmp.ne.s32.totalorder %s63, %s64
      %p75 = scmp.eq.s32.totalorder %s22, 0
      %p76 = por %p74, %p75
      %p77 = scmp.ne.s32.totalorder %s63, %s64
      %p78 = scmp.eq.s32.totalorder %s23, 15
      %p79 = por %p77, %p78
      %p81 = scmp.ne.s32.totalorder %s64, %s80
      %p82 = scmp.eq.s32.totalorder %s23, 0
      %p83 = por %p81, %p82
      %s85 = sadd.s32 %s84, 1
      %p88 = scmp.eq.s32.totalorder %s17, 15
      %p89 = scmp.ne.s32.totalorder %s84, %s86
      %p90 = scmp.eq.s32.totalorder %s17, 0
      %p91 = por %p89, %p90
      %p92 = scmp.ne.s32.totalorder %s84, %s86
      %p93 = scmp.eq.s32.totalorder %s22, 15
      %p94 = por %p92, %p93
      %p95 = scmp.ne.s32.totalorder %s86, %s87
      %p96 = scmp.eq.s32.totalorder %s22, 0
      %p97 = por %p95, %p96
      %p98 = scmp.ne.s32.totalorder %s86, %s87
      %p99 = scmp.eq.s32.totalorder %s23, 15
      %p100 = por %p98, %p99
      %p102 = scmp.ne.s32.totalorder %s87, %s101
      %p103 = scmp.eq.s32.totalorder %s23, 0
      %p104 = por %p102, %p103
      %s106 = sadd.s32 %s105, 1
      %p109 = scmp.eq.s32.totalorder %s17, 15
      %p110 = scmp.ne.s32.totalorder %s105, %s107
      %p111 = scmp.eq.s32.totalorder %s17, 0
      %p112 = por %p110, %p111
      %p113 = scmp.ne.s32.totalorder %s105, %s107
      %p114 = scmp.eq.s32.totalorder %s22, 15
      %p115 = por %p113, %p114
      %p116 = scmp.ne.s32.totalorder %s107, %s108
      %p117 = scmp.eq.s32.totalorder %s22, 0
      %p118 = por %p116, %p117
      %p119 = scmp.ne.s32.totalorder %s107, %s108
      %p120 = scmp.eq.s32.totalorder %s23, 15
      %p121 = por %p119, %p120
      %p123 = scmp.ne.s32.totalorder %s108, %s122
      %p124 = scmp.eq.s32.totalorder %s23, 0
      %p125 = por %p123, %p124
      %s127 = sadd.s32 %s126, 1
      %p130 = scmp.eq.s32.totalorder %s17, 15
      %p131 = scmp.ne.s32.totalorder %s126, %s128
      %p132 = scmp.eq.s32.totalorder %s17, 0
      %p133 = por %p131, %p132
      %p134 = scmp.ne.s32.totalorder %s126, %s128
      %p135 = scmp.eq.s32.totalorder %s22, 15
      %p136 = por %p134, %p135
      %p137 = scmp.ne.s32.totalorder %s128, %s129
      %p138 = scmp.eq.s32.totalorder %s22, 0
      %p139 = por %p137, %p138
      %p140 = scmp.ne.s32.totalorder %s128, %s129
      %p141 = scmp.eq.s32.totalorder %s23, 15
      %p142 = por %p140, %p141
      %p144 = scmp.ne.s32.totalorder %s129, %s143
      %p145 = scmp.eq.s32.totalorder %s23, 0
      %p146 = por %p144, %p145
      %s148 = sadd.s32 %s147, 1
      %p151 = scmp.eq.s32.totalorder %s17, 15
      %p152 = scmp.ne.s32.totalorder %s147, %s149
      %p153 = scmp.eq.s32.totalorder %s17, 0
      %p154 = por %p152, %p153
      %p155 = scmp.ne.s32.totalorder %s147, %s149
      %p156 = scmp.eq.s32.totalorder %s22, 15
      %p157 = por %p155, %p156
      %p158 = scmp.ne.s32.totalorder %s149, %s150
      %p159 = scmp.eq.s32.totalorder %s22, 0
      %p160 = por %p158, %p159
      %p161 = scmp.ne.s32.totalorder %s149, %s150
      %p162 = scmp.eq.s32.totalorder %s23, 15
      %p163 = por %p161, %p162
      %p165 = scmp.ne.s32.totalorder %s150, %s164
      %p166 = scmp.eq.s32.totalorder %s23, 0
      %p167 = por %p165, %p166
      %s169 = sadd.s32 %s168, 1
      %p172 = scmp.eq.s32.totalorder %s17, 15
      %p173 = scmp.ne.s32.totalorder %s168, %s170
      %p174 = scmp.eq.s32.totalorder %s17, 0
      %p175 = por %p173, %p174
      %p176 = scmp.ne.s32.totalorder %s168, %s170
      %p177 = scmp.eq.s32.totalorder %s22, 15
      %p178 = por %p176, %p177
      %p179 = scmp.ne.s32.totalorder %s170, %s171
      %p180 = scmp.eq.s32.totalorder %s22, 0
      %p181 = por %p179, %p180
      %p182 = scmp.ne.s32.totalorder %s170, %s171
      %p183 = scmp.eq.s32.totalorder %s23, 15
      %p184 = por %p182, %p183
      %p186 = scmp.ne.s32.totalorder %s171, %s185
      %p187 = scmp.eq.s32.totalorder %s23, 0
      %p188 = por %p186, %p187
      %p189 = scmp.le.s32.totalorder 1, %s17
      %p190 = scmp.lt.s32.totalorder %s17, 17
      %p191 = pnand %p189, %p190
      %p192 = pneg %p191
      // Predicated region
      $region9: #{tpu_custom_call.1} parent=5 // pred_check
        _
      $region10: #{tpu_custom_call.1} parent=5 // pred_check_branch
        %194 = sbr.rel (%p191) target = $region12
      $region11: #{tpu_custom_call.1} parent=5 // pred_region
        %s195 = ssub.s32 %s17, 1
        // Predicated region
        $region13: #{tpu_custom_call.1} parent=11 // pred_check
          %p196 = pneg %p50
        $region14: #{tpu_custom_call.1} parent=11 // pred_check_branch
          %198 = sbr.rel (%p196) target = $region16
        $region15: #{tpu_custom_call.1} parent=11 // pred_region
          %s200 = ssub.s32 1024, 1024
          %201 = vsyncadd [#allocation4], %s200
          %s202 = sshll.u32 [#allocation3], 4
          %s203 = int_to_ptr.vmem [resolvable:$true] %s202
          %208 = dma.hbm_to_vmem [thread:$0]  %s0, 1024, %s203, [#allocation4], 256, 256, 16
        $region16: #{tpu_custom_call.1} parent=11 // pred_fallthru
          _
        // Predicated region
        $region17: #{tpu_custom_call.1} parent=11 // pred_check
          %p209 = pneg %p97
        $region18: #{tpu_custom_call.1} parent=11 // pred_check_branch
          %211 = sbr.rel (%p209) target = $region20
        $region19: #{tpu_custom_call.1} parent=11 // pred_region
          _
        $region20: #{tpu_custom_call.1} parent=11 // pred_fallthru
          _
        // Predicated region
        $region21: #{tpu_custom_call.1} parent=11 // pred_check
          %p212 = pneg %p118
        $region22: #{tpu_custom_call.1} parent=11 // pred_check_branch
          %214 = sbr.rel (%p212) target = $region24
        $region23: #{tpu_custom_call.1} parent=11 // pred_region
          _
        $region24: #{tpu_custom_call.1} parent=11 // pred_fallthru
          _
        // Predicated region
        $region25: #{tpu_custom_call.1} parent=11 // pred_check
          %p215 = pneg %p139
        $region26: #{tpu_custom_call.1} parent=11 // pred_check_branch
          %217 = sbr.rel (%p215) target = $region28
        $region27: #{tpu_custom_call.1} parent=11 // pred_region
          %s219 = ssub.s32 512, 512
          %220 = vsyncadd [#allocation7], %s219
          %s221 = sshll.u32 [#allocation8], 4
          %s222 = int_to_ptr.vmem [resolvable:$true] %s221
          %227 = dma.hbm_to_vmem [thread:$0]  %s4, 512, %s222, [#allocation7], 64, 64, 4
        $region28: #{tpu_custom_call.1} parent=11 // pred_fallthru
          _
        // Predicated region
        $region29: #{tpu_custom_call.1} parent=11 // pred_check
          %p228 = pneg %p160
        $region30: #{tpu_custom_call.1} parent=11 // pred_check_branch
          %230 = sbr.rel (%p228) target = $region32
        $region31: #{tpu_custom_call.1} parent=11 // pred_region
          _
        $region32: #{tpu_custom_call.1} parent=11 // pred_fallthru
          _
      $region12: #{tpu_custom_call.1} parent=5 // pred_fallthru
        _
      %p231 = scmp.lt.s32.totalorder %s17, 16
      // Predicated region
      $region33: #{tpu_custom_call.1} parent=5 // pred_check
        %p232 = pneg %p231
      $region34: #{tpu_custom_call.1} parent=5 // pred_check_branch
        %234 = sbr.rel (%p232) target = $region36
      $region35: #{tpu_custom_call.1} parent=5 // pred_region
        // Predicated region
        $region37: #{tpu_custom_call.1} parent=35 // pred_check
          %p235 = pneg %p70
        $region38: #{tpu_custom_call.1} parent=35 // pred_check_branch
          %237 = sbr.rel (%p235) target = $region40
        $region39: #{tpu_custom_call.1} parent=35 // pred_region
          %s238 = sand.u32 %s17, 1
          %s239 = scalar_lea.sflag [#allocation7], %s238
          %s240 = sand.u32 %s60, 1
          %s241 = smul.addr %s240, 256
          %s242 = scalar_lea.vmem [#allocation6], %s241
          %s244 = ssub.s32 4096, 4096
          %245 = vsyncadd %s239, %s244
          %s246 = smul.addr %s25, 128
          %s247 = scalar_lea.hbm %s1, %s246
          %s248 = sshll.u32 %s242, 4
          %s249 = int_to_ptr.vmem [resolvable:$true] %s248
          %254 = dma.hbm_to_vmem [thread:$0]  %s247, 4096, %s249, %s239, 256, 128, 8
        $region40: #{tpu_custom_call.1} parent=35 // pred_fallthru
          _
      $region36: #{tpu_custom_call.1} parent=5 // pred_fallthru
        _
      %p255 = scmp.le.s32.totalorder 1, %s17
      %p256 = scmp.lt.s32.totalorder %s17, 17
      %p257 = pnand %p255, %p256
      %p258 = pneg %p257
      // Predicated region
      $region41: #{tpu_custom_call.1} parent=5 // pred_check
        _
      $region42: #{tpu_custom_call.1} parent=5 // pred_check_branch
        %260 = sbr.rel (%p257) target = $region44
      $region43: #{tpu_custom_call.1} parent=5 // pred_region
        %s261 = ssub.s32 %s17, 1
        // Predicated region
        $region45: #{tpu_custom_call.1} parent=43 // pred_check
          %p262 = pneg %p50
        $region46: #{tpu_custom_call.1} parent=43 // pred_check_branch
          %264 = sbr.rel (%p262) target = $region48
        $region47: #{tpu_custom_call.1} parent=43 // pred_region
          %265 = dma.done [#allocation4], 1024
        $region48: #{tpu_custom_call.1} parent=43 // pred_fallthru
          _
        %s266 = sand.u32 %s22, 1
        %s267 = scalar_lea.sflag [#allocation7], %s266
        %s268 = sand.u32 %s63, 1
        %s269 = smul.addr %s268, 256
        %s270 = scalar_lea.vmem [#allocation6], %s269
        // Predicated region
        $region49: #{tpu_custom_call.1} parent=43 // pred_check
          %p271 = pneg %p76
        $region50: #{tpu_custom_call.1} parent=43 // pred_check_branch
          %273 = sbr.rel (%p271) target = $region52
        $region51: #{tpu_custom_call.1} parent=43 // pred_region
          %274 = dma.done %s267, 4096
        $region52: #{tpu_custom_call.1} parent=43 // pred_fallthru
          _
        // Predicated region
        $region53: #{tpu_custom_call.1} parent=43 // pred_check
          %p275 = pneg %p139
        $region54: #{tpu_custom_call.1} parent=43 // pred_check_branch
          %277 = sbr.rel (%p275) target = $region56
        $region55: #{tpu_custom_call.1} parent=43 // pred_region
          %278 = dma.done [#allocation7], 512
        $region56: #{tpu_custom_call.1} parent=43 // pred_fallthru
          _
        %p279 = pneg %p50
        %p280 = pneg %p47
        %s281 = sand.u32 %s22, 1
        %s282 = scalar_lea.sflag [#allocation7], %s281
        %s283 = sand.u32 %s63, 1
        %s284 = smul.addr %s283, 256
        %s285 = scalar_lea.vmem [#allocation6], %s284
        %p286 = pneg %p76
        %p287 = pneg %p73
        %p288 = pneg %p97
        %p289 = pneg %p94
        %p290 = pneg %p118
        %p291 = pneg %p115
        %p292 = pneg %p139
        %p293 = pneg %p136
        %p294 = pneg %p160
        %p295 = pneg %p157
        %p296 = pneg %p181
        %p297 = pneg %p178
        %p298 = scmp.eq.s32.totalorder %s26, 0
        %p299 = scmp.eq.s32.totalorder %s27, 0
        %p300 = pnand %p298, %p299
        %p301 = pneg %p300
        // Predicated region
        $region57: #{tpu_custom_call.1} parent=43 // pred_check
          _
        $region58: #{tpu_custom_call.1} parent=43 // pred_check_branch
          %303 = sbr.rel (%p300) target = $region60
        $region59: #{tpu_custom_call.1} parent=43 // pred_region
          %v304 = vld [vmem:[#allocation3] sm:$0xff]
          %v305 = vld [vmem:[#allocation3 + $0x8] sm:$0xff]
          %v306 = vld [vmem:[#allocation3 + $0x10] sm:$0xff]
          %v307 = vld [vmem:[#allocation3 + $0x18] sm:$0xff]
          %v308 = vld [vmem:[#allocation3 + $0x20] sm:$0xff]
          %v309 = vld [vmem:[#allocation3 + $0x28] sm:$0xff]
          %v310 = vld [vmem:[#allocation3 + $0x30] sm:$0xff]
          %v311 = vld [vmem:[#allocation3 + $0x38] sm:$0xff]
          %s312 = scalar_lea.vmem [#allocation2], 64
          %313 = vst [vmem:[%s312] sm:$0xff] %v304
          %314 = vst [vmem:[%s312 + $0x8] sm:$0xff] %v305
          %315 = vst [vmem:[%s312 + $0x10] sm:$0xff] %v306
          %316 = vst [vmem:[%s312 + $0x18] sm:$0xff] %v307
          %317 = vst [vmem:[%s312 + $0x20] sm:$0xff] %v308
          %318 = vst [vmem:[%s312 + $0x28] sm:$0xff] %v309
          %319 = vst [vmem:[%s312 + $0x30] sm:$0xff] %v310
          %320 = vst [vmem:[%s312 + $0x38] sm:$0xff] %v311
        $region60: #{tpu_custom_call.1} parent=43 // pred_fallthru
          _
        %p321 = scmp.lt.s32.totalorder %s26, 0
        %s322 = ssub.s32 0, %s26
        %s323 = scalar_select %p321, %s322, %s26
        %s324 = sand.u32 %s323, 1
        %s325 = ssub.s32 0, %s324
        %s326 = scalar_select %p321, %s325, %s324
        %p327 = scmp.ne.s32.totalorder %s326, 0
        %p328 = scmp.lt.s32.totalorder %s326, 0
        %p329 = pnand %p328, %p327
        %p330 = pneg %p329
        %s331 = sadd.s32 %s326, 2
        %s332 = scalar_select %p330, %s331, %s326
        %s333 = ssub.s32 1, %s332
        %s334 = smul.u32 %s333, 8
        %s335 = smul.addr %s334, 8
        %s336 = scalar_lea.vmem [#allocation2], %s335
        %v337 = vld [vmem:[%s336] sm:$0xff]
        %v338 = vld [vmem:[%s336 + $0x8] sm:$0xff]
        %v339 = vld [vmem:[%s336 + $0x10] sm:$0xff]
        %v340 = vld [vmem:[%s336 + $0x18] sm:$0xff]
        %v341 = vld [vmem:[%s336 + $0x20] sm:$0xff]
        %v342 = vld [vmem:[%s336 + $0x28] sm:$0xff]
        %v343 = vld [vmem:[%s336 + $0x30] sm:$0xff]
        %v344 = vld [vmem:[%s336 + $0x38] sm:$0xff]
        %v345 = vld [vmem:[%s270] sm:$0xff]
        %v346 = vld [vmem:[%s270 + $0x8] sm:$0xff]
        %v347 = vld [vmem:[%s270 + $0x10] sm:$0xff]
        %v348 = vld [vmem:[%s270 + $0x18] sm:$0xff]
        %v349 = vld [vmem:[%s270 + $0x20] sm:$0xff]
        %v350 = vld [vmem:[%s270 + $0x28] sm:$0xff]
        %v351 = vld [vmem:[%s270 + $0x30] sm:$0xff]
        %v352 = vld [vmem:[%s270 + $0x38] sm:$0xff]
        %v353 = vld [vmem:[%s270 + $0x40] sm:$0xff]
        %v354 = vld [vmem:[%s270 + $0x48] sm:$0xff]
        %v355 = vld [vmem:[%s270 + $0x50] sm:$0xff]
        %v356 = vld [vmem:[%s270 + $0x58] sm:$0xff]
        %v357 = vld [vmem:[%s270 + $0x60] sm:$0xff]
        %v358 = vld [vmem:[%s270 + $0x68] sm:$0xff]
        %v359 = vld [vmem:[%s270 + $0x70] sm:$0xff]
        %v360 = vld [vmem:[%s270 + $0x78] sm:$0xff]
        %v361 = vld [vmem:[%s270 + $0x80] sm:$0xff]
        %v362 = vld [vmem:[%s270 + $0x88] sm:$0xff]
        %v363 = vld [vmem:[%s270 + $0x90] sm:$0xff]
        %v364 = vld [vmem:[%s270 + $0x98] sm:$0xff]
        %v365 = vld [vmem:[%s270 + $0xa0] sm:$0xff]
        %v366 = vld [vmem:[%s270 + $0xa8] sm:$0xff]
        %v367 = vld [vmem:[%s270 + $0xb0] sm:$0xff]
        %v368 = vld [vmem:[%s270 + $0xb8] sm:$0xff]
        %v369 = vld [vmem:[%s270 + $0xc0] sm:$0xff]
        %v370 = vld [vmem:[%s270 + $0xc8] sm:$0xff]
        %v371 = vld [vmem:[%s270 + $0xd0] sm:$0xff]
        %v372 = vld [vmem:[%s270 + $0xd8] sm:$0xff]
        %v373 = vld [vmem:[%s270 + $0xe0] sm:$0xff]
        %v374 = vld [vmem:[%s270 + $0xe8] sm:$0xff]
        %v375 = vld [vmem:[%s270 + $0xf0] sm:$0xff]
        %v376 = vld [vmem:[%s270 + $0xf8] sm:$0xff]
        %377 = vmatprep.subr.mxu0 0.0
        %378 = vmatpush1.msra.mxu0 %v345
        %379 = vmatprep.subr.mxu0 0.0
        %380 = vmatpush1.msra.mxu0 %v346
        %381 = vmatprep.subr.mxu0 0.0
        %382 = vmatpush1.msra.mxu0 %v347
        %383 = vmatprep.subr.mxu0 0.0
        %384 = vmatpush1.msra.mxu0 %v348
        %385 = vmatprep.subr.mxu0 0.0
        %386 = vmatpush1.msra.mxu0 %v349
        %387 = vmatprep.subr.mxu0 0.0
        %388 = vmatpush1.msra.mxu0 %v350
        %389 = vmatprep.subr.mxu0 0.0
        %390 = vmatpush1.msra.mxu0 %v351
        %391 = vmatprep.subr.mxu0 0.0
        %392 = vmatpush1.msra.mxu0 %v352
        %393 = vmatprep.subr.mxu0 0.0
        %394 = vmatpush1.msra.mxu0 %v353
        %395 = vmatprep.subr.mxu0 0.0
        %396 = vmatpush1.msra.mxu0 %v354
        %397 = vmatprep.subr.mxu0 0.0
        %398 = vmatpush1.msra.mxu0 %v355
        %399 = vmatprep.subr.mxu0 0.0
        %400 = vmatpush1.msra.mxu0 %v356
        %401 = vmatprep.subr.mxu0 0.0
        %402 = vmatpush1.msra.mxu0 %v357
        %403 = vmatprep.subr.mxu0 0.0
        %404 = vmatpush1.msra.mxu0 %v358
        %405 = vmatprep.subr.mxu0 0.0
        %406 = vmatpush1.msra.mxu0 %v359
        %407 = vmatprep.subr.mxu0 0.0
        %408 = vmatpush1.msra.mxu0 %v360
        %409 = vmatprep.subr.mxu0 0.0
        %410 = vmatpush1.msra.mxu0 %v361
        %411 = vmatprep.subr.mxu0 0.0
        %412 = vmatpush1.msra.mxu0 %v362
        %413 = vmatprep.subr.mxu0 0.0
        %414 = vmatpush1.msra.mxu0 %v363
        %415 = vmatprep.subr.mxu0 0.0
        %416 = vmatpush1.msra.mxu0 %v364
        %417 = vmatprep.subr.mxu0 0.0
        %418 = vmatpush1.msra.mxu0 %v365
        %419 = vmatprep.subr.mxu0 0.0
        %420 = vmatpush1.msra.mxu0 %v366
        %421 = vmatprep.subr.mxu0 0.0
        %422 = vmatpush1.msra.mxu0 %v367
        %423 = vmatprep.subr.mxu0 0.0
        %424 = vmatpush1.msra.mxu0 %v368
        %425 = vmatprep.subr.mxu0 0.0
        %426 = vmatpush1.msra.mxu0 %v369
        %427 = vmatprep.subr.mxu0 0.0
        %428 = vmatpush1.msra.mxu0 %v370
        %429 = vmatprep.subr.mxu0 0.0
        %430 = vmatpush1.msra.mxu0 %v371
        %431 = vmatprep.subr.mxu0 0.0
        %432 = vmatpush1.msra.mxu0 %v372
        %433 = vmatprep.subr.mxu0 0.0
        %434 = vmatpush1.msra.mxu0 %v373
        %435 = vmatprep.subr.mxu0 0.0
        %436 = vmatpush1.msra.mxu0 %v374
        %437 = vmatprep.subr.mxu0 0.0
        %438 = vmatpush1.msra.mxu0 %v375
        %439 = vmatprep.subr.mxu0 0.0
        %440 = vmatpush1.msra.mxu0 %v376
        %441 = vmatprep.mubr.f32.mxu0 %v338
        %442 = vmatmul.mubr.f32.gmra.mrb[0].mxu0 %v337
        %v443 = vpop.f32.mrb[0].mxu0
        %v444 = vadd.f32 0.0, %v443
        %v445 = vpop.f32.mrb[0].mxu0
        %446 = vmatprep.mubr.f32.mxu0 %v340
        %447 = vmatmul.mubr.f32.gmra.mrb[0].mxu0 %v339
        %v448 = vpop.f32.mrb[0].mxu0
        %v449 = vadd.f32 0.0, %v448
        %v450 = vpop.f32.mrb[0].mxu0
        %451 = vmatprep.mubr.f32.mxu0 %v342
        %452 = vmatmul.mubr.f32.gmra.mrb[0].mxu0 %v341
        %v453 = vpop.f32.mrb[0].mxu0
        %v454 = vadd.f32 0.0, %v453
        %v455 = vpop.f32.mrb[0].mxu0
        %456 = vmatprep.mubr.f32.mxu0 %v344
        %457 = vmatmul.mubr.f32.gmra.mrb[0].mxu0 %v343
        %v458 = vpop.f32.mrb[0].mxu0
        %v459 = vadd.f32 0.0, %v458
        %v460 = vpop.f32.mrb[0].mxu0
        %461 = vdwg.mxu0
        %s462 = smul.u32 %s26, 32
        %s463 = scalar_lea.vmem %s2, %s462
        %v464 = vld [vmem:[%s463] sm:$0xff]
        %v465 = vld [vmem:[%s463 + $0x8] sm:$0xff]
        %v466 = vld [vmem:[%s463 + $0x10] sm:$0xff]
        %v467 = vld [vmem:[%s463 + $0x18] sm:$0xff]
        %s468 = scalar_lea.vmem %s3, %s462
        %v469 = vld [vmem:[%s468] sm:$0xff]
        %v470 = vld [vmem:[%s468 + $0x8] sm:$0xff]
        %v471 = vld [vmem:[%s468 + $0x10] sm:$0xff]
        %v472 = vld [vmem:[%s468 + $0x18] sm:$0xff]
        %474 = vset.pattern.permute.xlu0 0
        %475 = vperm.xlu0 %474, %v469
        %v476 = vpop.permute.xlu0 %475
        %479 = vset.pattern.permute.xlu0 0
        %480 = vperm.xlu0 %479, %v470
        %v481 = vpop.permute.xlu0 %480
        %484 = vset.pattern.permute.xlu0 0
        %485 = vperm.xlu0 %484, %v471
        %v486 = vpop.permute.xlu0 %485
        %489 = vset.pattern.permute.xlu0 0
        %490 = vperm.xlu0 %489, %v472
        %v491 = vpop.permute.xlu0 %490
        %vm493 = vcmask 261120
        %v495 = vsel %vm493, %v464, 0
        %v498 = vsel %vm493, %v465, 0
        %v501 = vsel %vm493, %v466, 0
        %v504 = vsel %vm493, %v467, 0
        %506 = vmatprep.subr.mxu0 0.0
        %507 = vmatpush1.msra.mxu0 %v444
        %508 = vmatprep.subr.mxu0 0.0
        %509 = vmatpush1.msra.mxu0 %v449
        %510 = vmatprep.subr.mxu0 0.0
        %511 = vmatpush1.msra.mxu0 %v454
        %512 = vmatprep.subr.mxu0 0.0
        %513 = vmatpush1.msra.mxu0 %v459
        %514 = vmatprep.subr.mxu0 0.0
        %515 = vmatpush1.msra.mxu0 0.0
        %516 = vmatprep.subr.mxu0 0.0
        %517 = vmatpush1.msra.mxu0 0.0
        %518 = vmatprep.subr.mxu0 0.0
        %519 = vmatpush1.msra.mxu0 0.0
        %520 = vmatprep.subr.mxu0 0.0
        %521 = vmatpush1.msra.mxu0 0.0
        %522 = vmatprep.subr.mxu0 0.0
        %523 = vmatpush1.msra.mxu0 0.0
        %524 = vmatprep.subr.mxu0 0.0
        %525 = vmatpush1.msra.mxu0 0.0
        %526 = vmatprep.subr.mxu0 0.0
        %527 = vmatpush1.msra.mxu0 0.0
        %528 = vmatprep.subr.mxu0 0.0
        %529 = vmatpush1.msra.mxu0 0.0
        %530 = vmatprep.subr.mxu0 0.0
        %531 = vmatpush1.msra.mxu0 0.0
        %532 = vmatprep.subr.mxu0 0.0
        %533 = vmatpush1.msra.mxu0 0.0
        %534 = vmatprep.subr.mxu0 0.0
        %535 = vmatpush1.msra.mxu0 0.0
        %536 = vmatprep.subr.mxu0 0.0
        %537 = vmatpush1.msra.mxu0 0.0
        %538 = vmatprep.subr.mxu0 0.0
        %539 = vmatpush1.msra.mxu0 0.0
        %540 = vmatprep.subr.mxu0 0.0
        %541 = vmatpush1.msra.mxu0 0.0
        %542 = vmatprep.subr.mxu0 0.0
        %543 = vmatpush1.msra.mxu0 0.0
        %544 = vmatprep.subr.mxu0 0.0
        %545 = vmatpush1.msra.mxu0 0.0
        %546 = vmatprep.subr.mxu0 0.0
        %547 = vmatpush1.msra.mxu0 0.0
        %548 = vmatprep.subr.mxu0 0.0
        %549 = vmatpush1.msra.mxu0 0.0
        %550 = vmatprep.subr.mxu0 0.0
        %551 = vmatpush1.msra.mxu0 0.0
        %552 = vmatprep.subr.mxu0 0.0
        %553 = vmatpush1.msra.mxu0 0.0
        %554 = vmatprep.subr.mxu0 0.0
        %555 = vmatpush1.msra.mxu0 0.0
        %556 = vmatprep.subr.mxu0 0.0
        %557 = vmatpush1.msra.mxu0 0.0
        %558 = vmatprep.subr.mxu0 0.0
        %559 = vmatpush1.msra.mxu0 0.0
        %560 = vmatprep.subr.mxu0 0.0
        %561 = vmatpush1.msra.mxu0 0.0
        %562 = vmatprep.subr.mxu0 0.0
        %563 = vmatpush1.msra.mxu0 0.0
        %564 = vmatprep.subr.mxu0 0.0
        %565 = vmatpush1.msra.mxu0 0.0
        %566 = vmatprep.subr.mxu0 0.0
        %567 = vmatpush1.msra.mxu0 0.0
        %568 = vmatprep.subr.mxu0 0.0
        %569 = vmatpush1.msra.mxu0 0.0
        %570 = vmatprep.mubr.f32.mxu0 0.0
        %571 = vmatmul.mubr.f32.gmra.mrb[0].mxu0 %v495
        %v572 = vpop.f32.mrb[0].mxu0
        %v573 = vadd.f32 %v476, %v572
        %v574 = vpop.f32.mrb[0].mxu0
        %575 = vmatprep.mubr.f32.mxu0 0.0
        %576 = vmatmul.mubr.f32.gmra.mrb[0].mxu0 %v498
        %v577 = vpop.f32.mrb[0].mxu0
        %v578 = vadd.f32 %v481, %v577
        %v579 = vpop.f32.mrb[0].mxu0
        %580 = vmatprep.mubr.f32.mxu0 0.0
        %581 = vmatmul.mubr.f32.gmra.mrb[0].mxu0 %v501
        %v582 = vpop.f32.mrb[0].mxu0
        %v583 = vadd.f32 %v486, %v582
        %v584 = vpop.f32.mrb[0].mxu0
        %585 = vmatprep.mubr.f32.mxu0 0.0
        %586 = vmatmul.mubr.f32.gmra.mrb[0].mxu0 %v504
        %v587 = vpop.f32.mrb[0].mxu0
        %v588 = vadd.f32 %v491, %v587
        %v589 = vpop.f32.mrb[0].mxu0
        %590 = vdwg.mxu0
        %v591 = vmax.f32 %v573, 0.0
        %v592 = vmax.f32 %v578, 0.0
        %v593 = vmax.f32 %v583, 0.0
        %v594 = vmax.f32 %v588, 0.0
        %s595 = smul.u32 %s27, 128
        %p596 = scmp.eq.s32.totalorder %s332, 0
        // Predicated region
        $region61: #{tpu_custom_call.1} parent=43 // pred_check
          %p597 = pneg %p596
        $region62: #{tpu_custom_call.1} parent=43 // pred_check_branch
          %599 = sbr.rel (%p597) target = $region64
        $region63: #{tpu_custom_call.1} parent=43 // pred_region
          %s600 = sshra.s32 %s595, 7
          %s601 = sand.u32 %s595, 127
          %s602 = smul.addr %s600, 8
          %s603 = scalar_lea.vmem [#allocation2], %s602
          %604 = vst [vmem:[%s603] sm:$0xff] %v591
          %605 = vst [vmem:[%s603 + $0x10] sm:$0xff] %v592
          %606 = vst [vmem:[%s603 + $0x20] sm:$0xff] %v593
          %607 = vst [vmem:[%s603 + $0x30] sm:$0xff] %v594
        $region64: #{tpu_custom_call.1} parent=43 // pred_fallthru
          _
        %p608 = scmp.eq.s32.totalorder %s332, 1
        // Predicated region
        $region65: #{tpu_custom_call.1} parent=43 // pred_check
          %p609 = pneg %p608
        $region66: #{tpu_custom_call.1} parent=43 // pred_check_branch
          %611 = sbr.rel (%p609) target = $region68
        $region67: #{tpu_custom_call.1} parent=43 // pred_region
          %s612 = sshra.s32 %s595, 7
          %s613 = sand.u32 %s595, 127
          %s614 = sadd.s32 %s612, 8
          %s615 = smul.addr %s614, 8
          %s616 = scalar_lea.vmem [#allocation2], %s615
          %617 = vst [vmem:[%s616] sm:$0xff] %v591
          %618 = vst [vmem:[%s616 + $0x10] sm:$0xff] %v592
          %619 = vst [vmem:[%s616 + $0x20] sm:$0xff] %v593
          %620 = vst [vmem:[%s616 + $0x30] sm:$0xff] %v594
        $region68: #{tpu_custom_call.1} parent=43 // pred_fallthru
          _
        %s621 = smul.u32 %s26, 4
        %s622 = scalar_lea.vmem [#allocation8], %s621
        %v623 = vld [vmem:[%s622] sm:$0xf]
        %v625 = vsel %vm493, %v623, 0
        %627 = vmatprep.subr.mxu0 0.0
        %628 = vmatpush1.msra.mxu0 %v591
        %629 = vmatprep.subr.mxu0 0.0
        %630 = vmatpush1.msra.mxu0 %v592
        %631 = vmatprep.subr.mxu0 0.0
        %632 = vmatpush1.msra.mxu0 %v593
        %633 = vmatprep.subr.mxu0 0.0
        %634 = vmatpush1.msra.mxu0 %v594
        %635 = vmatprep.subr.mxu0 0.0
        %636 = vmatpush1.msra.mxu0 0.0
        %637 = vmatprep.subr.mxu0 0.0
        %638 = vmatpush1.msra.mxu0 0.0
        %639 = vmatprep.subr.mxu0 0.0
        %640 = vmatpush1.msra.mxu0 0.0
        %641 = vmatprep.subr.mxu0 0.0
        %642 = vmatpush1.msra.mxu0 0.0
        %643 = vmatprep.subr.mxu0 0.0
        %644 = vmatpush1.msra.mxu0 0.0
        %645 = vmatprep.subr.mxu0 0.0
        %646 = vmatpush1.msra.mxu0 0.0
        %647 = vmatprep.subr.mxu0 0.0
        %648 = vmatpush1.msra.mxu0 0.0
        %649 = vmatprep.subr.mxu0 0.0
        %650 = vmatpush1.msra.mxu0 0.0
        %651 = vmatprep.subr.mxu0 0.0
        %652 = vmatpush1.msra.mxu0 0.0
        %653 = vmatprep.subr.mxu0 0.0
        %654 = vmatpush1.msra.mxu0 0.0
        %655 = vmatprep.subr.mxu0 0.0
        %656 = vmatpush1.msra.mxu0 0.0
        %657 = vmatprep.subr.mxu0 0.0
        %658 = vmatpush1.msra.mxu0 0.0
        %659 = vmatprep.subr.mxu0 0.0
        %660 = vmatpush1.msra.mxu0 0.0
        %661 = vmatprep.subr.mxu0 0.0
        %662 = vmatpush1.msra.mxu0 0.0
        %663 = vmatprep.subr.mxu0 0.0
        %664 = vmatpush1.msra.mxu0 0.0
        %665 = vmatprep.subr.mxu0 0.0
        %666 = vmatpush1.msra.mxu0 0.0
        %667 = vmatprep.subr.mxu0 0.0
        %668 = vmatpush1.msra.mxu0 0.0
        %669 = vmatprep.subr.mxu0 0.0
        %670 = vmatpush1.msra.mxu0 0.0
        %671 = vmatprep.subr.mxu0 0.0
        %672 = vmatpush1.msra.mxu0 0.0
        %673 = vmatprep.subr.mxu0 0.0
        %674 = vmatpush1.msra.mxu0 0.0
        %675 = vmatprep.subr.mxu0 0.0
        %676 = vmatpush1.msra.mxu0 0.0
        %677 = vmatprep.subr.mxu0 0.0
        %678 = vmatpush1.msra.mxu0 0.0
        %679 = vmatprep.subr.mxu0 0.0
        %680 = vmatpush1.msra.mxu0 0.0
        %681 = vmatprep.subr.mxu0 0.0
        %682 = vmatpush1.msra.mxu0 0.0
        %683 = vmatprep.subr.mxu0 0.0
        %684 = vmatpush1.msra.mxu0 0.0
        %685 = vmatprep.subr.mxu0 0.0
        %686 = vmatpush1.msra.mxu0 0.0
        %687 = vmatprep.subr.mxu0 0.0
        %688 = vmatpush1.msra.mxu0 0.0
        %689 = vmatprep.subr.mxu0 0.0
        %690 = vmatpush1.msra.mxu0 0.0
        %691 = vmatprep.mubr.f32.mxu0 0.0
        %692 = vmatmul.mubr.f32.gmra.mrb[0].mxu0 %v625
        %v693 = vpop.f32.mrb[0].mxu0
        %v694 = vadd.f32 0.0, %v693
        %v695 = vpop.f32.mrb[0].mxu0
        %696 = vdwg.mxu0
        // Predicated region
        $region69: #{tpu_custom_call.1} parent=43 // pred_check
          %p697 = pneg %p298
        $region70: #{tpu_custom_call.1} parent=43 // pred_check_branch
          %699 = sbr.rel (%p697) target = $region72
        $region71: #{tpu_custom_call.1} parent=43 // pred_region
          %v700 = vld [vmem:[%s5] sm:$0xf]
          %702 = vset.pattern.permute.xlu0 0
          %703 = vperm.xlu0 %702, %v700
          %v704 = vpop.permute.xlu0 %703
          %v706 = vadd.f32 %v704, %v694
          %s707 = sshra.s32 %s595, 7
          %s708 = sand.u32 %s595, 127
          %s709 = smul.addr %s707, 4
          %s710 = scalar_lea.vmem [#allocation9], %s709
          %711 = vst [vmem:[%s710] sm:$0xf] %v706
        $region72: #{tpu_custom_call.1} parent=43 // pred_fallthru
          _
        %p712 = scmp.ne.s32.totalorder %s26, 0
        // Predicated region
        $region73: #{tpu_custom_call.1} parent=43 // pred_check
          %p713 = pneg %p712
        $region74: #{tpu_custom_call.1} parent=43 // pred_check_branch
          %715 = sbr.rel (%p713) target = $region76
        $region75: #{tpu_custom_call.1} parent=43 // pred_region
          %s716 = sshra.s32 %s595, 7
          %s717 = sand.u32 %s595, 127
          %s718 = smul.addr %s716, 4
          %s719 = scalar_lea.vmem [#allocation9], %s718
          %v720 = vld [vmem:[%s719] sm:$0xf]
          %v721 = vadd.f32 %v720, %v694
          %722 = vst [vmem:[%s719] sm:$0xf] %v721
        $region76: #{tpu_custom_call.1} parent=43 // pred_fallthru
          _
        // Predicated region
        $region77: #{tpu_custom_call.1} parent=43 // pred_check
          %p723 = pneg %p178
        $region78: #{tpu_custom_call.1} parent=43 // pred_check_branch
          %725 = sbr.rel (%p723) target = $region80
        $region79: #{tpu_custom_call.1} parent=43 // pred_region
          %s727 = ssub.s32 128, 128
          %728 = vsyncadd [#allocation5], %s727
          %s730 = sshll.u32 [#allocation9], 4
          %s731 = int_to_ptr.vmem [resolvable:$true] %s730
          %733 = dma.vmem_to_hbm [thread:$0]  %s731, 128, %s6, [#allocation5]
        $region80: #{tpu_custom_call.1} parent=43 // pred_fallthru
          _
        // Predicated region
        $region81: #{tpu_custom_call.1} parent=43 // pred_check
          %p734 = pneg %p178
        $region82: #{tpu_custom_call.1} parent=43 // pred_check_branch
          %736 = sbr.rel (%p734) target = $region84
        $region83: #{tpu_custom_call.1} parent=43 // pred_region
          %737 = dma.done [#allocation5], 128
        $region84: #{tpu_custom_call.1} parent=43 // pred_fallthru
          _
      $region44: #{tpu_custom_call.1} parent=5 // pred_fallthru
        _
      %p738 = scmp.le.s32.totalorder 2, %s17
      // Predicated region
      $region85: #{tpu_custom_call.1} parent=5 // pred_check
        %p739 = pneg %p738
      $region86: #{tpu_custom_call.1} parent=5 // pred_check_branch
        %741 = sbr.rel (%p739) target = $region88
      $region87: #{tpu_custom_call.1} parent=5 // pred_region
        %s742 = ssub.s32 %s17, 2
      $region88: #{tpu_custom_call.1} parent=5 // pred_fallthru
        _
    $region6: #{tpu_custom_call.1} parent=1 // loop_footer
      %s21 = sadd.s32 1, %s17
    $region7: #{tpu_custom_call.1} parent=1 // loop_footer_branch
      %16 = sbr.rel target = $region3
    $region8: #{tpu_custom_call.1} parent=1 // loop_exit
      _
    %743 = vsyncpa [#allocation4], 1
    %s744 = scalar_lea.sflag [#allocation4], 1
    %745 = vsyncpa %s744, 1
    %746 = vsyncpa [#allocation7], 1
    %s747 = scalar_lea.sflag [#allocation7], 1
    %748 = vsyncpa %s747, 1
    %749 = vsyncpa [#allocation5], 1
    %s750 = scalar_lea.sflag [#allocation5], 1
    %751 = vsyncpa %s750, 1

</llo_original>
